<compile_context>
chip_gen: v6e
topology: v6e:2x2x1
jax: 0.10.0
libtpu: 0.0.40
codegen_flags: <defaults>
</compile_context>

<pallas_src>
import jax
import jax.numpy as jnp
from jax.experimental import pallas as pl
from jax.experimental.pallas import tpu as pltpu

B, F, H = 2, 32, 32        # batch, input features, hidden width
NEG_SLOPE = 0.2            # LeakyReLU negative slope of the discriminator
LANES = 128                # lane-dense output tile width

# Packed parameter buffer layout (rows of the (F+2, H) buffer):
#   [0:F) -> W1 (F, H)
#   F     -> b1 (1, H)
#   F+1   -> W2^T row (1, H)
_B1_ROW = F
_W2_ROW = F + 1
_P_ROWS = F + 2


def adversarial_loss_kernel(real_ref, gen_ref, p_ref, b2_ref, out_ref, x_ref):
    """Fused discriminator MLP forward + the three BCE-with-logits losses.

    real_ref : (B, F)    VMEM  real_data
    gen_ref  : (B, F)    VMEM  generated_data (detach has no forward effect)
    p_ref    : (F+2, H)  VMEM  packed discriminator params (W1 | b1 | W2^T)
    b2_ref   : (1, 1)    SMEM  output-layer bias (scalar)
    out_ref  : (1, 128)  VMEM  lanes [d_real, d_fake, g_loss, d_loss, 0, ...]
    x_ref    : (2B, F)   VMEM  scratch used to stack real + fake
    """
    # Stack the two tiny batches in VMEM (two sub-tile stores) so the
    # discriminator runs as ONE matmul chain over (2B, F).
    x_ref[0:B, :] = real_ref[...]
    x_ref[B:2 * B, :] = gen_ref[...]
    x = x_ref[...]                                   # (2B, F)

    w1 = p_ref[:F, :]                                # (F, H)
    b1 = p_ref[_B1_ROW:_B1_ROW + 1, :]               # (1, H)
    w2_row = p_ref[_W2_ROW:_W2_ROW + 1, :]           # (1, H) == W2^T
    b2 = b2_ref[0, 0]                                # scalar from SMEM

    # Layer 1: single MXU matmul over the stacked real+fake batch.
    h = jnp.dot(x, w1, preferred_element_type=jnp.float32) + b1
    h = jnp.where(h > 0, h, NEG_SLOPE * h)           # LeakyReLU(0.2)

    # Layer 2 (N=1): VPU broadcast-multiply + lane reduce (no 2nd MXU tile).
    logits = jnp.sum(h * w2_row, axis=-1, keepdims=True) + b2   # (2B, 1)

    # BCEWithLogits pieces, stable softplus shared between both targets:
    #   softplus(z)  = max(z, 0)  + log1p(exp(-|z|))   (target 0)
    #   softplus(-z) = max(-z, 0) + log1p(exp(-|z|))   (target 1)
    common = jnp.log1p(jnp.exp(-jnp.abs(logits)))    # one exp + one log1p
    sp_pos = jnp.maximum(logits, 0.0) + common       # BCE(logit, 0) per-row
    sp_neg = jnp.maximum(-logits, 0.0) + common      # BCE(logit, 1) per-row

    # Fused reduction: pack the masked per-row terms into lanes 0..3 of one
    # (2B, 128) array and do a SINGLE sublane (axis-0) reduction.
    #   lane 0: real rows, sp_neg            -> B  * d_real_loss
    #   lane 1: fake rows, sp_pos            -> B  * d_fake_loss
    #   lane 2: fake rows, sp_neg            -> B  * g_loss
    #   lane 3: real->sp_neg, fake->sp_pos   -> 2B * d_loss
    shape = (2 * B, LANES)
    row = jax.lax.broadcasted_iota(jnp.int32, shape, 0)
    lane = jax.lax.broadcasted_iota(jnp.int32, shape, 1)
    is_real = row < B
    terms = jnp.where(lane == 0, jnp.where(is_real, sp_neg, 0.0),
            jnp.where(lane == 1, jnp.where(is_real, 0.0, sp_pos),
            jnp.where(lane == 2, jnp.where(is_real, 0.0, sp_neg),
            jnp.where(lane == 3, jnp.where(is_real, sp_neg, sp_pos), 0.0))))
    sums = jnp.sum(terms, axis=0, keepdims=True)     # (1, 128), one XLU reduce

    out_lane = jax.lax.broadcasted_iota(jnp.int32, (1, LANES), 1)
    scale = jnp.where(out_lane == 3, 0.5 / B, 1.0 / B)
    # Lane-dense (1, 128) store -> unmasked vst.
    out_ref[...] = jnp.where(out_lane < 4, sums * scale, 0.0)


def pack_discriminator_params(params):
    """One-time packing of the (static) discriminator parameters.

    Call this at init / parameter-update time, NOT per loss evaluation.
    """
    w1, b1, w2, b2 = params                                # (F,H),(1,H),(H,1),(1,1)
    packed = jnp.concatenate([w1, b1, w2.T], axis=0)       # (F+2, H)
    return packed, b2


@jax.jit
def adversarial_loss(generated_data, real_data, packed_params, b2):
    """Same outputs as AdversarialLoss.forward: dict of four scalar losses."""
    vmem = pl.BlockSpec(memory_space=pltpu.MemorySpace.VMEM)
    smem = pl.BlockSpec(memory_space=pltpu.MemorySpace.SMEM)
    out = pl.pallas_call(
        adversarial_loss_kernel,
        out_shape=jax.ShapeDtypeStruct((1, LANES), jnp.float32),
        in_specs=[vmem, vmem, vmem, smem],
        out_specs=vmem,
        scratch_shapes=[pltpu.VMEM((2 * B, F), jnp.float32)],
    )(real_data, generated_data, packed_params, b2)
    return {
        'discriminator_loss': out[0, 3],
        'generator_loss': out[0, 2],
        'd_real_loss': out[0, 0],
        'd_fake_loss': out[0, 1],
    }


def init_discriminator_params(key):
    k1, k2, k3 = jax.random.split(key, 3)
    w1 = jax.random.normal(k1, (F, H), jnp.float32) * 0.1
    b1 = jnp.zeros((1, H), jnp.float32)
    w2 = jax.random.normal(k2, (H, 1), jnp.float32) * 0.1
    b2 = jax.random.normal(k3, (1, 1), jnp.float32) * 0.1
    return w1, b1, w2, b2


if __name__ == "__main__":
    key = jax.random.PRNGKey(0)
    k_gen, k_real, k_params = jax.random.split(key, 3)

    generated_data = jax.random.normal(k_gen, (B, F), jnp.float32)
    real_data = jax.random.normal(k_real, (B, F), jnp.float32)
    params = init_discriminator_params(k_params)

    # Static parameter packing happens once here (init), not per call.
    packed_params, b2 = pack_discriminator_params(params)

    out = adversarial_loss(generated_data, real_data, packed_params, b2)
    out = jax.block_until_ready(out)

    # Pure-JAX reference for sanity.
    def ref_disc(x, p):
        w1, b1, w2, b2_ = p
        h = jnp.dot(x, w1, precision=jax.lax.Precision.HIGHEST) + b1
        h = jnp.where(h > 0, h, NEG_SLOPE * h)
        return jnp.dot(h, w2, precision=jax.lax.Precision.HIGHEST) + b2_

    def ref_bce(logits, target):
        return jnp.mean(jnp.maximum(logits, 0) - logits * target
                        + jnp.log1p(jnp.exp(-jnp.abs(logits))))

    rl = ref_disc(real_data, params)
    gl = ref_disc(generated_data, params)
    ref = {
        'd_real_loss': ref_bce(rl, 1.0),
        'd_fake_loss': ref_bce(gl, 0.0),
        'generator_loss': ref_bce(gl, 1.0),
    }
    ref['discriminator_loss'] = (ref['d_real_loss'] + ref['d_fake_loss']) / 2

    for k in ('discriminator_loss', 'generator_loss', 'd_real_loss', 'd_fake_loss'):
        assert jnp.allclose(out[k], ref[k], atol=1e-5, rtol=1e-4), (k, out[k], ref[k])

    print("KERNEL_OK")
</pallas_src>

<mosaic_0001>
module attributes {stable_mosaic.version = 11 : i64} {
  func.func @adversarial_loss_kernel(%arg0: memref<2x32xf32, #tpu.memory_space<vmem>>, %arg1: memref<2x32xf32, #tpu.memory_space<vmem>>, %arg2: memref<34x32xf32, #tpu.memory_space<vmem>>, %arg3: memref<1x1xf32, #tpu.memory_space<smem>>, %arg4: memref<1x128xf32, #tpu.memory_space<vmem>>, %arg5: memref<4x32xf32, #tpu.memory_space<vmem>>) attributes {dimension_semantics = [], scalar_prefetch = 0 : i64, scratch_operands = 1 : i64, tpu.core_type = #tpu.core_type<tc>} {
    %c0 = arith.constant 0 : index
    %c0_0 = arith.constant 0 : index
    %0 = vector.load %arg0[%c0, %c0_0] : memref<2x32xf32, #tpu.memory_space<vmem>>, vector<2x32xf32>
    %c0_1 = arith.constant 0 : index
    %c0_2 = arith.constant 0 : index
    %1 = vector.load %arg5[%c0_1, %c0_2] : memref<4x32xf32, #tpu.memory_space<vmem>>, vector<2x32xf32>
    tpu.vector_store %arg5[%c0_1, %c0_2], %0 {strides = array<i32>} : memref<4x32xf32, #tpu.memory_space<vmem>>, vector<2x32xf32>,
    %c0_3 = arith.constant 0 : index
    %c0_4 = arith.constant 0 : index
    %2 = vector.load %arg1[%c0_3, %c0_4] : memref<2x32xf32, #tpu.memory_space<vmem>>, vector<2x32xf32>
    %c2 = arith.constant 2 : index
    %c0_5 = arith.constant 0 : index
    %3 = vector.load %arg5[%c2, %c0_5] : memref<4x32xf32, #tpu.memory_space<vmem>>, vector<2x32xf32>
    tpu.vector_store %arg5[%c2, %c0_5], %2 {strides = array<i32>} : memref<4x32xf32, #tpu.memory_space<vmem>>, vector<2x32xf32>,
    %c0_6 = arith.constant 0 : index
    %c0_7 = arith.constant 0 : index
    %4 = vector.load %arg5[%c0_6, %c0_7] : memref<4x32xf32, #tpu.memory_space<vmem>>, vector<4x32xf32>
    %c0_8 = arith.constant 0 : index
    %c0_9 = arith.constant 0 : index
    %5 = vector.load %arg2[%c0_8, %c0_9] : memref<34x32xf32, #tpu.memory_space<vmem>>, vector<32x32xf32>
    %c32 = arith.constant 32 : index
    %c0_10 = arith.constant 0 : index
    %6 = vector.load %arg2[%c32, %c0_10] : memref<34x32xf32, #tpu.memory_space<vmem>>, vector<1x32xf32>
    %c33 = arith.constant 33 : index
    %c0_11 = arith.constant 0 : index
    %7 = vector.load %arg2[%c33, %c0_11] : memref<34x32xf32, #tpu.memory_space<vmem>>, vector<1x32xf32>
    %c0_12 = arith.constant 0 : index
    %c0_13 = arith.constant 0 : index
    %8 = memref.load %arg3[%c0_12, %c0_13] : memref<1x1xf32, #tpu.memory_space<smem>>
    %cst = arith.constant dense<0.000000e+00> : vector<4x32xf32>
    %9 = tpu.matmul %4, %5, %cst {dimension_numbers = #tpu.dot_dimension_numbers<[1], [0], [0], [1], [0, 0, 1, 1], [], []>} : vector<4x32xf32>, vector<32x32xf32>, vector<4x32xf32> -> vector<4x32xf32>
    %10 = vector.broadcast %6 : vector<1x32xf32> to vector<4x32xf32>
    %11 = arith.addf %9, %10 : vector<4x32xf32>
    %cst_14 = arith.constant 0.000000e+00 : f32
    %12 = vector.broadcast %cst_14 : f32 to vector<4x32xf32>
    %13 = arith.cmpf ogt, %11, %12 : vector<4x32xf32>
    %cst_15 = arith.constant 2.000000e-01 : f32
    %14 = vector.broadcast %cst_15 : f32 to vector<4x32xf32>
    %15 = arith.mulf %14, %11 : vector<4x32xf32>
    %16 = arith.select %13, %11, %15 : vector<4x32xi1>, vector<4x32xf32>
    %17 = vector.broadcast %7 : vector<1x32xf32> to vector<4x32xf32>
    %18 = arith.mulf %16, %17 : vector<4x32xf32>
    %cst_16 = arith.constant dense<0.000000e+00> : vector<4xf32>
    %19 = vector.multi_reduction <add>, %18, %cst_16 [1] : vector<4x32xf32> to vector<4xf32>
    %20 = vector.shape_cast %19 : vector<4xf32> to vector<4x1xf32>
    %21 = vector.broadcast %8 : f32 to vector<4x1xf32>
    %22 = arith.addf %20, %21 : vector<4x1xf32>
    %23 = math.absf %22 : vector<4x1xf32>
    %cst_17 = arith.constant 0.000000e+00 : f32
    %24 = vector.broadcast %cst_17 : f32 to vector<4x1xf32>
    %25 = arith.subf %24, %23 : vector<4x1xf32>
    %26 = math.exp %25 : vector<4x1xf32>
    %27 = math.log1p %26 : vector<4x1xf32>
    %cst_18 = arith.constant 0.000000e+00 : f32
    %28 = vector.broadcast %cst_18 : f32 to vector<4x1xf32>
    %29 = arith.maximumf %22, %28 : vector<4x1xf32>
    %30 = arith.addf %29, %27 : vector<4x1xf32>
    %cst_19 = arith.constant 0.000000e+00 : f32
    %31 = vector.broadcast %cst_19 : f32 to vector<4x1xf32>
    %32 = arith.subf %31, %22 : vector<4x1xf32>
    %cst_20 = arith.constant 0.000000e+00 : f32
    %33 = vector.broadcast %cst_20 : f32 to vector<4x1xf32>
    %34 = arith.maximumf %32, %33 : vector<4x1xf32>
    %35 = arith.addf %34, %27 : vector<4x1xf32>
    %36 = tpu.iota {dimensions = array<i32: 0>} : vector<4x128xi32>
    %37 = tpu.iota {dimensions = array<i32: 1>} : vector<4x128xi32>
    %c2_i32 = arith.constant 2 : i32
    %38 = vector.broadcast %c2_i32 : i32 to vector<4x128xi32>
    %39 = arith.cmpi slt, %36, %38 : vector<4x128xi32>
    %c0_i32 = arith.constant 0 : i32
    %40 = vector.broadcast %c0_i32 : i32 to vector<4x128xi32>
    %41 = arith.cmpi eq, %37, %40 : vector<4x128xi32>
    %cst_21 = arith.constant 0.000000e+00 : f32
    %42 = vector.shape_cast %35 : vector<4x1xf32> to vector<4x1xf32>
    %43 = vector.broadcast %42 : vector<4x1xf32> to vector<4x128xf32>
    %44 = vector.broadcast %cst_21 : f32 to vector<4x128xf32>
    %45 = arith.select %39, %43, %44 : vector<4x128xi1>, vector<4x128xf32>
    %c1_i32 = arith.constant 1 : i32
    %46 = vector.broadcast %c1_i32 : i32 to vector<4x128xi32>
    %47 = arith.cmpi eq, %37, %46 : vector<4x128xi32>
    %cst_22 = arith.constant 0.000000e+00 : f32
    %48 = vector.broadcast %cst_22 : f32 to vector<4x128xf32>
    %49 = vector.shape_cast %30 : vector<4x1xf32> to vector<4x1xf32>
    %50 = vector.broadcast %49 : vector<4x1xf32> to vector<4x128xf32>
    %51 = arith.select %39, %48, %50 : vector<4x128xi1>, vector<4x128xf32>
    %c2_i32_23 = arith.constant 2 : i32
    %52 = vector.broadcast %c2_i32_23 : i32 to vector<4x128xi32>
    %53 = arith.cmpi eq, %37, %52 : vector<4x128xi32>
    %cst_24 = arith.constant 0.000000e+00 : f32
    %54 = vector.broadcast %cst_24 : f32 to vector<4x128xf32>
    %55 = vector.shape_cast %35 : vector<4x1xf32> to vector<4x1xf32>
    %56 = vector.broadcast %55 : vector<4x1xf32> to vector<4x128xf32>
    %57 = arith.select %39, %54, %56 : vector<4x128xi1>, vector<4x128xf32>
    %c3_i32 = arith.constant 3 : i32
    %58 = vector.broadcast %c3_i32 : i32 to vector<4x128xi32>
    %59 = arith.cmpi eq, %37, %58 : vector<4x128xi32>
    %60 = vector.shape_cast %35 : vector<4x1xf32> to vector<4x1xf32>
    %61 = vector.broadcast %60 : vector<4x1xf32> to vector<4x128xf32>
    %62 = vector.shape_cast %30 : vector<4x1xf32> to vector<4x1xf32>
    %63 = vector.broadcast %62 : vector<4x1xf32> to vector<4x128xf32>
    %64 = arith.select %39, %61, %63 : vector<4x128xi1>, vector<4x128xf32>
    %cst_25 = arith.constant 0.000000e+00 : f32
    %65 = vector.broadcast %cst_25 : f32 to vector<4x128xf32>
    %66 = arith.select %59, %64, %65 : vector<4x128xi1>, vector<4x128xf32>
    %67 = arith.select %53, %57, %66 : vector<4x128xi1>, vector<4x128xf32>
    %68 = arith.select %47, %51, %67 : vector<4x128xi1>, vector<4x128xf32>
    %69 = arith.select %41, %45, %68 : vector<4x128xi1>, vector<4x128xf32>
    %cst_26 = arith.constant dense<0.000000e+00> : vector<128xf32>
    %70 = vector.multi_reduction <add>, %69, %cst_26 [0] : vector<4x128xf32> to vector<128xf32>
    %71 = vector.shape_cast %70 : vector<128xf32> to vector<1x128xf32>
    %72 = tpu.iota {dimensions = array<i32: 1>} : vector<1x128xi32>
    %c3_i32_27 = arith.constant 3 : i32
    %73 = vector.broadcast %c3_i32_27 : i32 to vector<1x128xi32>
    %74 = arith.cmpi eq, %72, %73 : vector<1x128xi32>
    %cst_28 = arith.constant 2.500000e-01 : f32
    %cst_29 = arith.constant 5.000000e-01 : f32
    %75 = vector.broadcast %cst_28 : f32 to vector<1x128xf32>
    %76 = vector.broadcast %cst_29 : f32 to vector<1x128xf32>
    %77 = arith.select %74, %75, %76 : vector<1x128xi1>, vector<1x128xf32>
    %c4_i32 = arith.constant 4 : i32
    %78 = vector.broadcast %c4_i32 : i32 to vector<1x128xi32>
    %79 = arith.cmpi slt, %72, %78 : vector<1x128xi32>
    %80 = arith.mulf %71, %77 : vector<1x128xf32>
    %cst_30 = arith.constant 0.000000e+00 : f32
    %81 = vector.broadcast %cst_30 : f32 to vector<1x128xf32>
    %82 = arith.select %79, %80, %81 : vector<1x128xi1>, vector<1x128xf32>
    %c0_31 = arith.constant 0 : index
    %c0_32 = arith.constant 0 : index
    %83 = vector.load %arg4[%c0_31, %c0_32] : memref<1x128xf32, #tpu.memory_space<vmem>>, vector<1x128xf32>
    tpu.vector_store %arg4[%c0_31, %c0_32], %82 {strides = array<i32>} : memref<1x128xf32, #tpu.memory_space<vmem>>, vector<1x128xf32>,
    return
  }
}

</mosaic_0001>

<llo_original>
// kernel: adversarial_loss.1
$region0: #{adversarial_loss.1}
  #allocation0 [shape = 'u32[]', space=smem, size = 0x4, offset = 0x4, fixed_abs, tag = 'smem constant byte address 0x4 - core index']
  #allocation1 [shape = 'u32[144,128]{1,0:T(1,128)}', space=vmem, size = 0x12000, scoped, tag = 'internal scratch']
  #allocation2 [shape = 'f32[4,32]{1,0:T(4,128)}', space=vmem, size = 0x800, scoped, tag = 'scratch operand']
  #allocation3 [shape = 'f32[1,1]{1,0:T(1,128)S(6)}', space=smem, size = 0x200, scoped, tag = 'scoped memory for adversarial_loss.1']
  %s0 = inlined_call_operand.vmem [shape: f32[2,32], index: 0, kind: input, shape index: {}]
  %s1 = inlined_call_operand.vmem [shape: f32[2,32], index: 1, kind: input, shape index: {}]
  %s2 = inlined_call_operand.vmem [shape: f32[34,32], index: 2, kind: input, shape index: {}]
  %s3 = inlined_call_operand.<no memory space> [shape: f32[1,1], index: 3, kind: input, shape index: {}]
  %s4 = inlined_call_operand.vmem [shape: f32[1,128], index: 4, kind: output, shape index: {}]
  %s5 = sld [smem:[#allocation0]]
  $region26: #{adversarial_loss.1} parent=0
    _
  %s7 = ssub.s32 1, %s5
  %s8 = scalar_select 0, %s7, %s5
  %9 = sst [smem:[#allocation3]] %s3
  // Predicated region
  $region2: #{adversarial_loss.1} parent=0 // pred_check
    _
  $region3: #{adversarial_loss.1} parent=0 // pred_check_branch
    %11 = sbr.rel (0) target = $region5
  $region4: #{adversarial_loss.1} parent=0 // pred_region
    _
  $region5: #{adversarial_loss.1} parent=0 // pred_fallthru
    _
  // Predicated region
  $region6: #{adversarial_loss.1} parent=0 // pred_check
    _
  $region7: #{adversarial_loss.1} parent=0 // pred_check_branch
    %13 = sbr.rel (0) target = $region9
  $region8: #{adversarial_loss.1} parent=0 // pred_region
    _
  $region9: #{adversarial_loss.1} parent=0 // pred_fallthru
    _
  // Predicated region
  $region10: #{adversarial_loss.1} parent=0 // pred_check
    _
  $region11: #{adversarial_loss.1} parent=0 // pred_check_branch
    %15 = sbr.rel (0) target = $region13
  $region12: #{adversarial_loss.1} parent=0 // pred_region
    _
  $region13: #{adversarial_loss.1} parent=0 // pred_fallthru
    _
  // Predicated region
  $region14: #{adversarial_loss.1} parent=0 // pred_check
    _
  $region15: #{adversarial_loss.1} parent=0 // pred_check_branch
    %17 = sbr.rel (0) target = $region17
  $region16: #{adversarial_loss.1} parent=0 // pred_region
    _
  $region17: #{adversarial_loss.1} parent=0 // pred_fallthru
    _
  %v18 = vld [vmem:[%s0] sm:$0x3]
  %vm19 = vcmask 254976
  %20 = vst.msk [vmem:[#allocation2] sm:$0x3] %vm19, %v18
  %v21 = vld [vmem:[%s1] sm:$0x3]
  %22 = vst.msk [vmem:[#allocation2 + $0x2] sm:$0x3] %vm19, %v21
  %v23 = vld [vmem:[#allocation2] sm:$0xf]
  %v24 = vld [vmem:[%s2] sm:$0xff]
  %v25 = vld [vmem:[%s2 + $0x8] sm:$0xff]
  %v26 = vld [vmem:[%s2 + $0x10] sm:$0xff]
  %v27 = vld [vmem:[%s2 + $0x18] sm:$0xff]
  %v28 = vld [vmem:[%s2 + $0x20] sm:$0x1]
  %v29 = vld [vmem:[%s2 + $0x21] sm:$0x1]
  %s30 = sld [smem:[#allocation3]]
  %v31 = vlaneseq
  %v32 = vshrl.u32 %v31, 7
  %v33 = vsub.s32 0, %v32
  %v34 = vrot.slane %v28, %v33
  %vm35 = vcmask 261120
  %v37 = vsel %vm35, %v23, 0
  %39 = vmatprep.subr.mxu0 0.0
  %40 = vmatpush1.msra.mxu0 0.0
  %41 = vmatprep.subr.mxu0 0.0
  %42 = vmatpush1.msra.mxu0 0.0
  %43 = vmatprep.subr.mxu0 0.0
  %44 = vmatpush1.msra.mxu0 0.0
  %45 = vmatprep.subr.mxu0 0.0
  %46 = vmatpush1.msra.mxu0 0.0
  %47 = vmatprep.subr.mxu0 0.0
  %48 = vmatpush1.msra.mxu0 0.0
  %49 = vmatprep.subr.mxu0 0.0
  %50 = vmatpush1.msra.mxu0 0.0
  %51 = vmatprep.subr.mxu0 0.0
  %52 = vmatpush1.msra.mxu0 0.0
  %53 = vmatprep.subr.mxu0 0.0
  %54 = vmatpush1.msra.mxu0 0.0
  %55 = vmatprep.subr.mxu0 0.0
  %56 = vmatpush1.msra.mxu0 0.0
  %57 = vmatprep.subr.mxu0 0.0
  %58 = vmatpush1.msra.mxu0 0.0
  %59 = vmatprep.subr.mxu0 0.0
  %60 = vmatpush1.msra.mxu0 0.0
  %61 = vmatprep.subr.mxu0 0.0
  %62 = vmatpush1.msra.mxu0 0.0
  %63 = vmatprep.subr.mxu0 0.0
  %64 = vmatpush1.msra.mxu0 %v27
  %65 = vmatprep.subr.mxu0 0.0
  %66 = vmatpush1.msra.mxu0 %v26
  %67 = vmatprep.subr.mxu0 0.0
  %68 = vmatpush1.msra.mxu0 %v25
  %69 = vmatprep.subr.mxu0 0.0
  %70 = vmatpush1.msra.mxu0 %v24
  %71 = vmatprep.subr.mxu0 0.0
  %72 = vmatpush2.msra.mxu0 0.0
  %73 = vmatprep.subr.mxu0 0.0
  %74 = vmatpush2.msra.mxu0 0.0
  %75 = vmatprep.subr.mxu0 0.0
  %76 = vmatpush2.msra.mxu0 0.0
  %77 = vmatprep.subr.mxu0 0.0
  %78 = vmatpush2.msra.mxu0 0.0
  %79 = vmatprep.subr.mxu0 0.0
  %80 = vmatpush2.msra.mxu0 0.0
  %81 = vmatprep.subr.mxu0 0.0
  %82 = vmatpush2.msra.mxu0 0.0
  %83 = vmatprep.subr.mxu0 0.0
  %84 = vmatpush2.msra.mxu0 0.0
  %85 = vmatprep.subr.mxu0 0.0
  %86 = vmatpush2.msra.mxu0 0.0
  %87 = vmatprep.subr.mxu0 0.0
  %88 = vmatpush2.msra.mxu0 0.0
  %89 = vmatprep.subr.mxu0 0.0
  %90 = vmatpush2.msra.mxu0 0.0
  %91 = vmatprep.subr.mxu0 0.0
  %92 = vmatpush2.msra.mxu0 0.0
  %93 = vmatprep.subr.mxu0 0.0
  %94 = vmatpush2.msra.mxu0 0.0
  %95 = vmatprep.subr.mxu0 0.0
  %96 = vmatpush2.msra.mxu0 0.0
  %97 = vmatprep.subr.mxu0 0.0
  %98 = vmatpush2.msra.mxu0 0.0
  %99 = vmatprep.subr.mxu0 0.0
  %100 = vmatpush2.msra.mxu0 0.0
  %101 = vmatprep.subr.mxu0 0.0
  %102 = vmatpush2.msra.mxu0 0.0
  %103 = vmatprep.mubr.f32.mxu0 0.0
  %104 = vmatmul.mubr.f32.gmra.mxu0 %v37
  %v105 = vpop.f32.mrf.mxu0
  %v106 = vadd.f32 %v34, %v105
  %v107 = vpop.f32.mrf.mxu0
  %108 = vdwg.mxu0
  %vm109 = vcmp.gt.f32.partialorder %v106, 0.0
  %v110 = vmul.f32 %v106, 0.2
  %v111 = vsel %vm109, %v106, %v110
  %v112 = vlaneseq
  %v113 = vshrl.u32 %v112, 7
  %v114 = vsub.s32 0, %v113
  %v115 = vrot.slane %v29, %v114
  %v116 = vmul.f32 %v111, %v115
  %vm117 = vcmask 257024
  %v118 = vsel %vm117, %v116, 0.0
  %119 = vadd.xlane.f32.xlu0 %v118
  %v120 = vpop.xlane.xlu0 %119
  %v121 = vstv %s30
  %v122 = vadd.f32 %v120, %v121
  %v123 = vand.u32 2147483647, %v122
  %v124 = vsub.f32 0.0, %v123
  %v125 = vmul.f32 %v124, 1.442695
  %v126 = vpow.pop %v125
  %v127 = vadd.f32 %v126, 1.0
  %v128 = vlog2.pop %v127
  %v129 = vmul.f32 %v128, 0.6931472
  %v130 = vmul.f32 -0.5, %v126
  %v131 = vadd.f32 %v130, 1.0
  %v132 = vmul.f32 %v131, %v126
  %v133 = vand.u32 2147483647, %v126
  %vm134 = vcmp.lt.f32.partialorder %v133, 0.0004427343
  %v135 = vsel %vm134, %v132, %v129
  %v136 = vmax.f32 %v122, 0.0
  %v137 = vadd.f32 %v136, %v135
  %v138 = vsub.f32 0.0, %v122
  %v139 = vmax.f32 %v138, 0.0
  %v140 = vadd.f32 %v139, %v135
  %v141 = vlaneseq
  %v142 = vshrl.u32 %v141, 7
  %v143 = vlaneseq
  %v144 = vand.u32 %v143, 127
  %vm145 = vcmp.lt.s32.totalorder %v142, 2
  %vm146 = vcmp.eq.s32.totalorder %v144, 0
  %v147 = vsel %vm145, %v140, 0.0
  %vm148 = vcmp.eq.s32.totalorder %v144, 1
  %v149 = vsel %vm145, 0.0, %v137
  %vm150 = vcmp.eq.s32.totalorder %v144, 2
  %v151 = vsel %vm145, 0.0, %v140
  %vm152 = vcmp.eq.s32.totalorder %v144, 3
  %v153 = vsel %vm145, %v140, %v137
  %v154 = vsel %vm152, %v153, 0.0
  %v155 = vsel %vm150, %v151, %v154
  %v156 = vsel %vm148, %v149, %v155
  %v157 = vsel %vm146, %v147, %v156
  %vm158 = vcmask 1043456
  %v159 = vsel %vm158, %v157, 0.0
  %v160 = vrot.slane %v159, 4
  %v161 = vadd.f32 %v159, %v160
  %v162 = vrot.slane %v161, 2
  %v163 = vadd.f32 %v161, %v162
  %v164 = vrot.slane %v163, 1
  %v165 = vadd.f32 %v163, %v164
  %v166 = vsel %vm152, 0.25, 0.5
  %vm167 = vcmp.lt.s32.totalorder %v144, 4
  %v168 = vmul.f32 %v165, %v166
  %v169 = vsel %vm167, %v168, 0.0
  %170 = vst [vmem:[%s4] sm:$0x1] %v169
  // Predicated region
  $region18: #{adversarial_loss.1} parent=0 // pred_check
    _
  $region19: #{adversarial_loss.1} parent=0 // pred_check_branch
    %172 = sbr.rel (0) target = $region21
  $region20: #{adversarial_loss.1} parent=0 // pred_region
    _
  $region21: #{adversarial_loss.1} parent=0 // pred_fallthru
    _
  // Predicated region
  $region22: #{adversarial_loss.1} parent=0 // pred_check
    _
  $region23: #{adversarial_loss.1} parent=0 // pred_check_branch
    %174 = sbr.rel (0) target = $region25
  $region24: #{adversarial_loss.1} parent=0 // pred_region
    _
  $region25: #{adversarial_loss.1} parent=0 // pred_fallthru
    _

</llo_original>
